<compile_context>
chip_gen: v7x
topology: tpu7x:2x2x1
jax: 0.10.0
libtpu: 0.0.40
codegen_flags: <defaults>
</compile_context>

<pallas_src>
import functools

import jax
import jax.numpy as jnp
from jax.experimental import pallas as pl
from jax.experimental.pallas import tpu as pltpu


def _round_up(x, m):
    return (x + m - 1) // m * m


def _cdiv(a, b):
    return (a + b - 1) // b


def _choose_m_block(m_rows, row_align):
    """Sublane-aligned M block, <=512 rows, >=2 grid steps when big enough
    (v7x has 2 TensorCores; a 1-step grid would leave one idle)."""
    m_al = _round_up(m_rows, row_align)
    if m_al <= 2 * row_align:
        return m_al
    n_blocks = max(2, _cdiv(m_al, 512))
    return _round_up(_cdiv(m_al, n_blocks), row_align)


def _matmul_bias_kernel(p_ref, w_ref, b_ref, o_ref):
    """One M block per grid step: o = p @ w + b.

    p_ref: [M_blk, K_pad]   im2col patches (compute dtype)
    w_ref: [K_pad, OC_pad]  flattened weight (compute dtype, grid-invariant)
    b_ref: [1, OC_pad]      bias (f32, grid-invariant)
    o_ref: [M_blk, OC_pad]  lane-dense output block
    """
    acc = jnp.dot(p_ref[...], w_ref[...], preferred_element_type=jnp.float32)
    o_ref[...] = (acc + b_ref[...]).astype(o_ref.dtype)


@functools.partial(
    jax.jit,
    static_argnames=("stride", "padding", "dilation", "compute_dtype"))
def stream_conv2d(x, cache, weight, bias=None,
                  stride=(1, 1), padding=(0, 0), dilation=(1, 1),
                  compute_dtype=None):
    """x: [B, C, 1, F]; cache: [B, C, T_size-1, F];
    weight: [OC, C, KT, KF]; bias: [OC] or None.
    Returns (outp [B, OC, T_out, F_out], out_cache [B, C, T_size-1, F])."""
    if compute_dtype is None:
        compute_dtype = x.dtype
    sT, sF = stride
    pT, pF = padding
    dT, dF = dilation

    # ---- streaming cache update (torch: inp = cat([cache, x]); cache=inp[:,:,1:]) ----
    inp = jnp.concatenate([cache, x], axis=2)               # [B, C, T, F]
    out_cache = inp[:, :, 1:, :]

    B, C, T, F = inp.shape
    OC, Cw, KT, KF = weight.shape
    assert Cw == C  # TODO(synk): groups > 1 (grouped conv) not implemented.

    if bias is None:
        bias = jnp.zeros((OC,), dtype=jnp.float32)

    # ---- channels-last + spatial zero padding (fused under jit) ----
    inp_cl = jnp.transpose(inp, (0, 2, 3, 1)).astype(compute_dtype)  # [B,T,F,C]
    if pT or pF:
        inp_cl = jnp.pad(inp_cl, ((0, 0), (pT, pT), (pF, pF), (0, 0)))
    Tp, Fp = inp_cl.shape[1], inp_cl.shape[2]
    T_out = (Tp - dT * (KT - 1) - 1) // sT + 1
    F_out = (Fp - dF * (KF - 1) - 1) // sF + 1

    # ---- wrapper-side im2col: kernel gets a lane-contiguous [M, Kc] slab ----
    # Tap order (kt, kf, c) matches the flattened weight below.  The strided
    # slices + stack fuse into one XLA copy under jit and cost ~KT*KF x the
    # (tiny, per-frame) activation in HBM traffic.
    cols = []
    for kt in range(KT):
        for kf in range(KF):
            win = jax.lax.slice(
                inp_cl,
                (0, kt * dT, kf * dF, 0),
                (B, kt * dT + (T_out - 1) * sT + 1,
                 kf * dF + (F_out - 1) * sF + 1, C),
                (1, sT, sF, 1))                              # [B, T_out, F_out, C]
            cols.append(win)
    patches = jnp.stack(cols, axis=3)                        # [B,T_out,F_out,KT*KF,C]

    M = B * T_out * F_out
    Kc = KT * KF * C
    patches = patches.reshape(M, Kc)

    # ---- pad to TPU-friendly tiles ----
    row_align = 16 if jnp.dtype(compute_dtype).itemsize < 4 else 8
    K_pad = _round_up(Kc, row_align)        # contraction axis: sublane-aligned
    OC_pad = _round_up(OC, 128)             # output lanes: unmasked full vst
    M_blk = _choose_m_block(M, row_align)
    M_pad = _round_up(M, M_blk)

    patches = jnp.pad(patches, ((0, M_pad - M), (0, K_pad - Kc)))
    w_k = (jnp.transpose(weight, (2, 3, 1, 0))               # (kt, kf, c, oc)
           .reshape(Kc, OC).astype(compute_dtype))
    w_k = jnp.pad(w_k, ((0, K_pad - Kc), (0, OC_pad - OC)))
    b_k = jnp.pad(bias.astype(jnp.float32), (0, OC_pad - OC)).reshape(1, OC_pad)

    grid = (M_pad // M_blk,)
    out_mat = pl.pallas_call(
        _matmul_bias_kernel,
        out_shape=jax.ShapeDtypeStruct((M_pad, OC_pad), x.dtype),
        grid=grid,
        in_specs=[
            pl.BlockSpec((M_blk, K_pad), lambda i: (i, 0)),
            pl.BlockSpec((K_pad, OC_pad), lambda i: (0, 0)),   # grid-invariant
            pl.BlockSpec((1, OC_pad), lambda i: (0, 0)),       # grid-invariant
        ],
        out_specs=pl.BlockSpec((M_blk, OC_pad), lambda i: (i, 0)),
        compiler_params=pltpu.CompilerParams(
            dimension_semantics=("parallel",)),
    )(patches, w_k, b_k)

    # strip padding, back to the PyTorch NCHW convention (fused under jit)
    outp = (out_mat[:M, :OC]
            .reshape(B, T_out, F_out, OC)
            .transpose(0, 3, 1, 2))                           # [B, OC, T_out, F_out]
    return outp, out_cache


if __name__ == "__main__":
    # StreamConv2d(in_channels=4, out_channels=8, kernel_size=(3, 3))
    B, C_in, OC = 2, 4, 8
    KT, KF = 3, 3
    F = 16

    key = jax.random.PRNGKey(0)
    k_x, k_c, k_w, k_b = jax.random.split(key, 4)
    x = jax.random.normal(k_x, (B, C_in, 1, F), dtype=jnp.float32)           # [bs, C, 1, F]
    cache = jax.random.normal(k_c, (B, C_in, KT - 1, F), dtype=jnp.float32)  # [bs, C, T-1, F]
    weight = jax.random.normal(k_w, (OC, C_in, KT, KF), dtype=jnp.float32) * 0.1
    bias = jax.random.normal(k_b, (OC,), dtype=jnp.float32) * 0.1

    # ---- test 1: default stride/padding/dilation (the streaming fast path) ----
    outp, out_cache = stream_conv2d(x, cache, weight, bias)
    outp = jax.block_until_ready(outp)
    out_cache = jax.block_until_ready(out_cache)

    inp_ref = jnp.concatenate([cache, x], axis=2)
    ref = jax.lax.conv_general_dilated(
        inp_ref, weight, window_strides=(1, 1), padding=((0, 0), (0, 0)),
        rhs_dilation=(1, 1), dimension_numbers=("NCHW", "OIHW", "NCHW"),
    ) + bias.reshape(1, -1, 1, 1)

    assert outp.shape == (B, OC, 1, F - KF + 1), outp.shape
    assert out_cache.shape == (B, C_in, KT - 1, F), out_cache.shape
    assert jnp.allclose(outp, ref, rtol=1e-3, atol=1e-3), "mismatch vs reference conv"
    assert jnp.allclose(out_cache, inp_ref[:, :, 1:, :]), "cache mismatch"

    # ---- test 2: strided / padded / dilated frequency axis ----
    stride2, padding2, dilation2 = (1, 2), (0, 1), (1, 2)
    outp2, out_cache2 = stream_conv2d(x, cache, weight, bias,
                                      stride=stride2, padding=padding2,
                                      dilation=dilation2)
    outp2 = jax.block_until_ready(outp2)
    ref2 = jax.lax.conv_general_dilated(
        inp_ref, weight, window_strides=stride2,
        padding=((0, 0), (1, 1)), rhs_dilation=dilation2,
        dimension_numbers=("NCHW", "OIHW", "NCHW"),
    ) + bias.reshape(1, -1, 1, 1)
    assert outp2.shape == ref2.shape, (outp2.shape, ref2.shape)
    assert jnp.allclose(outp2, ref2, rtol=1e-3, atol=1e-3), "mismatch (strided/dilated)"
    assert jnp.allclose(out_cache2, inp_ref[:, :, 1:, :]), "cache mismatch (strided)"

    print("KERNEL_OK")
</pallas_src>

<mosaic_0001>
module attributes {stable_mosaic.version = 11 : i64} {
  func.func @_matmul_bias_kernel(%arg0: i32, %arg1: memref<16x40xf32, #tpu.memory_space<vmem>>, %arg2: memref<40x128xf32, #tpu.memory_space<vmem>>, %arg3: memref<1x128xf32, #tpu.memory_space<vmem>>, %arg4: memref<16x128xf32, #tpu.memory_space<vmem>>) attributes {dimension_semantics = [#tpu.dimension_semantics<parallel>], iteration_bounds = array<i64: 2>, scalar_prefetch = 0 : i64, scratch_operands = 0 : i64, tpu.core_type = #tpu.core_type<tc>, window_params = [{transform_indices = @transform_0, window_bounds = array<i64: 16, 40>}, {pipeline_mode = #tpu.pipeline_mode<synchronous>, transform_indices = @transform_1, window_bounds = array<i64: 40, 128>}, {pipeline_mode = #tpu.pipeline_mode<synchronous>, transform_indices = @transform_2, window_bounds = array<i64: 1, 128>}, {transform_indices = @transform_3, window_bounds = array<i64: 16, 128>}]} {
    %c0 = arith.constant 0 : index
    %c0_0 = arith.constant 0 : index
    %0 = vector.load %arg1[%c0, %c0_0] : memref<16x40xf32, #tpu.memory_space<vmem>>, vector<16x40xf32>
    %c0_1 = arith.constant 0 : index
    %c0_2 = arith.constant 0 : index
    %1 = vector.load %arg2[%c0_1, %c0_2] : memref<40x128xf32, #tpu.memory_space<vmem>>, vector<40x128xf32>
    %cst = arith.constant dense<0.000000e+00> : vector<16x128xf32>
    %2 = tpu.matmul %0, %1, %cst {dimension_numbers = #tpu.dot_dimension_numbers<[1], [0], [0], [1], [0, 0, 1, 1], [], []>} : vector<16x40xf32>, vector<40x128xf32>, vector<16x128xf32> -> vector<16x128xf32>
    %c0_3 = arith.constant 0 : index
    %c0_4 = arith.constant 0 : index
    %3 = vector.load %arg3[%c0_3, %c0_4] : memref<1x128xf32, #tpu.memory_space<vmem>>, vector<1x128xf32>
    %4 = vector.broadcast %3 : vector<1x128xf32> to vector<16x128xf32>
    %5 = arith.addf %2, %4 : vector<16x128xf32>
    %c0_5 = arith.constant 0 : index
    %c0_6 = arith.constant 0 : index
    %6 = vector.load %arg4[%c0_5, %c0_6] : memref<16x128xf32, #tpu.memory_space<vmem>>, vector<16x128xf32>
    tpu.vector_store %arg4[%c0_5, %c0_6], %5 {strides = array<i32>} : memref<16x128xf32, #tpu.memory_space<vmem>>, vector<16x128xf32>,
    return
  }
  func.func @transform_0(%arg0: i32) -> (i32, i32) {
    %c0_i32 = arith.constant 0 : i32
    %c0_i32_0 = arith.constant 0 : i32
    return %arg0, %c0_i32 : i32, i32
  }
  func.func @transform_1(%arg0: i32) -> (i32, i32) {
    %c0_i32 = arith.constant 0 : i32
    %c0_i32_0 = arith.constant 0 : i32
    %c0_i32_1 = arith.constant 0 : i32
    return %c0_i32, %c0_i32_0 : i32, i32
  }
  func.func @transform_2(%arg0: i32) -> (i32, i32) {
    %c0_i32 = arith.constant 0 : i32
    %c0_i32_0 = arith.constant 0 : i32
    %c0_i32_1 = arith.constant 0 : i32
    return %c0_i32, %c0_i32_0 : i32, i32
  }
  func.func @transform_3(%arg0: i32) -> (i32, i32) {
    %c0_i32 = arith.constant 0 : i32
    %c0_i32_0 = arith.constant 0 : i32
    return %arg0, %c0_i32 : i32, i32
  }
}

</mosaic_0001>

<llo_original>
// kernel: stream_conv2d.1
$region0: #{stream_conv2d.1}
  #allocation0 [shape = 'u32[]', space=smem, size = 0x4, offset = 0x4, fixed_abs, tag = 'smem constant byte address 0x4 - core index']
  #allocation1 [shape = 'u32[144,128]{1,0:T(1,128)}', space=vmem, size = 0x12000, scoped, tag = 'internal scratch']
  %s0 = inlined_call_operand.vmem [shape: f32[32,40], index: 0, kind: input, shape index: {}]
  %s1 = inlined_call_operand.vmem [shape: f32[40,128], index: 1, kind: input, shape index: {}]
  %s2 = inlined_call_operand.vmem [shape: f32[1,128], index: 2, kind: input, shape index: {}]
  %s3 = inlined_call_operand.vmem [shape: f32[32,128], index: 3, kind: output, shape index: {}]
  %s4 = sld [smem:[#allocation0]]
  $region45: #{stream_conv2d.1} parent=0
    _
  %s6 = ssub.s32 1, %s4
  %s7 = scalar_select 0, %s6, %s4
  loop: start=0, step=1, limit=4
  $region2: #{stream_conv2d.1} parent=0 // loop_pre_header
    _
  $region3: #{stream_conv2d.1} parent=0 // loop_header
    %s9 = sphi 0, %s13
    %p10 = scmp.ge.s32.totalorder %s9, 4
    %s19 = sphi 0, %s21
    %s22 = sphi 0, %s19
    %s23 = sphi 0, %s22
    %s39 = sphi 0, %s23
    %s43 = sphi 0, %s43
    %s45 = sphi 0, %s43
    %s46 = sphi 0, %s45
    %s60 = sphi 0, %s46
    %s64 = sphi 0, %s64
    %s66 = sphi 0, %s64
    %s67 = sphi 0, %s66
    %s81 = sphi 0, %s67
    %s87 = sphi 0, %s89
    %s90 = sphi 0, %s87
    %s91 = sphi 0, %s90
    %s107 = sphi 0, %s91
  $region4: #{stream_conv2d.1} parent=0 // loop_header_branch
    %12 = sbr.rel (%p10) target = $region8
  $region5: #{stream_conv2d.1} parent=0 // loop_body
    %s14 = ssub.s32 %s9, 1
    %s15 = ssub.s32 %s9, 2
    %s16 = sadd.s32 %s9, 1
    %s17 = ssub.s32 %s9, %s16
    %p18 = scmp.eq.s32.totalorder %s17, 0
    %s20 = sadd.s32 %s19, 1
    %s21 = scalar_select %p18, %s19, %s20
    %p24 = pneg %p18
    %p25 = scmp.eq.s32.totalorder %s9, 1
    %p26 = por %p24, %p25
    %p27 = scmp.ne.s32.totalorder %s19, %s22
    %p28 = scmp.eq.s32.totalorder %s9, 0
    %p29 = por %p27, %p28
    %p30 = scmp.ne.s32.totalorder %s19, %s22
    %p31 = scmp.eq.s32.totalorder %s14, 1
    %p32 = por %p30, %p31
    %p33 = scmp.ne.s32.totalorder %s22, %s23
    %p34 = scmp.eq.s32.totalorder %s14, 0
    %p35 = por %p33, %p34
    %p36 = scmp.ne.s32.totalorder %s22, %s23
    %p37 = scmp.eq.s32.totalorder %s15, 1
    %p38 = por %p36, %p37
    %p40 = scmp.ne.s32.totalorder %s23, %s39
    %p41 = scmp.eq.s32.totalorder %s15, 0
    %p42 = por %p40, %p41
    %s44 = sadd.s32 %s43, 1
    %p47 = scmp.eq.s32.totalorder %s9, 1
    %p48 = scmp.ne.s32.totalorder %s43, %s45
    %p49 = scmp.eq.s32.totalorder %s9, 0
    %p50 = por %p48, %p49
    %p51 = scmp.ne.s32.totalorder %s43, %s45
    %p52 = scmp.eq.s32.totalorder %s14, 1
    %p53 = por %p51, %p52
    %p54 = scmp.ne.s32.totalorder %s45, %s46
    %p55 = scmp.eq.s32.totalorder %s14, 0
    %p56 = por %p54, %p55
    %p57 = scmp.ne.s32.totalorder %s45, %s46
    %p58 = scmp.eq.s32.totalorder %s15, 1
    %p59 = por %p57, %p58
    %p61 = scmp.ne.s32.totalorder %s46, %s60
    %p62 = scmp.eq.s32.totalorder %s15, 0
    %p63 = por %p61, %p62
    %s65 = sadd.s32 %s64, 1
    %p68 = scmp.eq.s32.totalorder %s9, 1
    %p69 = scmp.ne.s32.totalorder %s64, %s66
    %p70 = scmp.eq.s32.totalorder %s9, 0
    %p71 = por %p69, %p70
    %p72 = scmp.ne.s32.totalorder %s64, %s66
    %p73 = scmp.eq.s32.totalorder %s14, 1
    %p74 = por %p72, %p73
    %p75 = scmp.ne.s32.totalorder %s66, %s67
    %p76 = scmp.eq.s32.totalorder %s14, 0
    %p77 = por %p75, %p76
    %p78 = scmp.ne.s32.totalorder %s66, %s67
    %p79 = scmp.eq.s32.totalorder %s15, 1
    %p80 = por %p78, %p79
    %p82 = scmp.ne.s32.totalorder %s67, %s81
    %p83 = scmp.eq.s32.totalorder %s15, 0
    %p84 = por %p82, %p83
    %s85 = ssub.s32 %s9, %s16
    %p86 = scmp.eq.s32.totalorder %s85, 0
    %s88 = sadd.s32 %s87, 1
    %s89 = scalar_select %p86, %s87, %s88
    %p92 = pneg %p86
    %p93 = scmp.eq.s32.totalorder %s9, 1
    %p94 = por %p92, %p93
    %p95 = scmp.ne.s32.totalorder %s87, %s90
    %p96 = scmp.eq.s32.totalorder %s9, 0
    %p97 = por %p95, %p96
    %p98 = scmp.ne.s32.totalorder %s87, %s90
    %p99 = scmp.eq.s32.totalorder %s14, 1
    %p100 = por %p98, %p99
    %p101 = scmp.ne.s32.totalorder %s90, %s91
    %p102 = scmp.eq.s32.totalorder %s14, 0
    %p103 = por %p101, %p102
    %p104 = scmp.ne.s32.totalorder %s90, %s91
    %p105 = scmp.eq.s32.totalorder %s15, 1
    %p106 = por %p104, %p105
    %p108 = scmp.ne.s32.totalorder %s91, %s107
    %p109 = scmp.eq.s32.totalorder %s15, 0
    %p110 = por %p108, %p109
    %p111 = scmp.le.s32.totalorder 1, %s9
    %p112 = scmp.lt.s32.totalorder %s9, 3
    %p113 = pnand %p111, %p112
    %p114 = pneg %p113
    // Predicated region
    $region9: #{stream_conv2d.1} parent=5 // pred_check
      _
    $region10: #{stream_conv2d.1} parent=5 // pred_check_branch
      %116 = sbr.rel (%p113) target = $region12
    $region11: #{stream_conv2d.1} parent=5 // pred_region
      %s117 = ssub.s32 %s9, 1
      // Predicated region
      $region13: #{stream_conv2d.1} parent=11 // pred_check
        %p118 = pneg %p56
      $region14: #{stream_conv2d.1} parent=11 // pred_check_branch
        %120 = sbr.rel (%p118) target = $region16
      $region15: #{stream_conv2d.1} parent=11 // pred_region
        _
      $region16: #{stream_conv2d.1} parent=11 // pred_fallthru
        _
      // Predicated region
      $region17: #{stream_conv2d.1} parent=11 // pred_check
        %p121 = pneg %p77
      $region18: #{stream_conv2d.1} parent=11 // pred_check_branch
        %123 = sbr.rel (%p121) target = $region20
      $region19: #{stream_conv2d.1} parent=11 // pred_region
        _
      $region20: #{stream_conv2d.1} parent=11 // pred_fallthru
        _
    $region12: #{stream_conv2d.1} parent=5 // pred_fallthru
      _
    %p124 = scmp.lt.s32.totalorder %s9, 2
    // Predicated region
    $region21: #{stream_conv2d.1} parent=5 // pred_check
      %p125 = pneg %p124
    $region22: #{stream_conv2d.1} parent=5 // pred_check_branch
      %127 = sbr.rel (%p125) target = $region24
    $region23: #{stream_conv2d.1} parent=5 // pred_region
      // Predicated region
      $region25: #{stream_conv2d.1} parent=23 // pred_check
        %p128 = pneg %p29
      $region26: #{stream_conv2d.1} parent=23 // pred_check_branch
        %130 = sbr.rel (%p128) target = $region28
      $region27: #{stream_conv2d.1} parent=23 // pred_region
        %s131 = smul.u32 2, %s9
        %p132 = scmp.lt.s32.totalorder %s131, 3
        %s133 = scalar_select %p132, %s131, 3
        %s134 = smul.addr %s133, 8
        %s135 = scalar_lea.vmem %s0, %s134
        %s136 = smul.u32 2, %s9
      $region28: #{stream_conv2d.1} parent=23 // pred_fallthru
        _
    $region24: #{stream_conv2d.1} parent=5 // pred_fallthru
      _
    %p137 = scmp.le.s32.totalorder 1, %s9
    %p138 = scmp.lt.s32.totalorder %s9, 3
    %p139 = pnand %p137, %p138
    %p140 = pneg %p139
    // Predicated region
    $region29: #{stream_conv2d.1} parent=5 // pred_check
      _
    $region30: #{stream_conv2d.1} parent=5 // pred_check_branch
      %142 = sbr.rel (%p139) target = $region32
    $region31: #{stream_conv2d.1} parent=5 // pred_region
      %s143 = ssub.s32 %s9, 1
      %s144 = smul.u32 2, %s14
      %p145 = scmp.lt.s32.totalorder %s144, 3
      %s146 = scalar_select %p145, %s144, 3
      %s147 = smul.addr %s146, 8
      %s148 = scalar_lea.vmem %s0, %s147
      %p149 = pneg %p35
      %p150 = pneg %p32
      %p151 = pneg %p56
      %p152 = pneg %p53
      %p153 = pneg %p77
      %p154 = pneg %p74
      %p155 = pneg %p103
      %p156 = pneg %p100
      %s157 = smul.u32 2, %s14
      %p158 = scmp.lt.s32.totalorder %s157, 3
      %s159 = scalar_select %p158, %s157, 3
      %s160 = smul.addr %s159, 8
      %s161 = scalar_lea.vmem %s3, %s160
      %s162 = smul.u32 2, %s14
      %p163 = scmp.lt.s32.totalorder %s162, 3
      %s164 = scalar_select %p163, %s162, 3
      %s165 = smul.addr %s164, 8
      %s166 = scalar_lea.vmem %s0, %s165
      %s167 = smul.u32 2, %s14
      %s168 = smul.u32 2, %s14
      %p169 = scmp.lt.s32.totalorder %s168, 3
      %s170 = scalar_select %p169, %s168, 3
      %s171 = smul.addr %s170, 8
      %s172 = scalar_lea.vmem %s3, %s171
      %s173 = smul.u32 2, %s14
      %v174 = vld [vmem:[%s166] sm:$0xff]
      %v175 = vld [vmem:[%s166 + $0x8] sm:$0xff]
      %v176 = vld [vmem:[%s1] sm:$0xff]
      %v177 = vld [vmem:[%s1 + $0x8] sm:$0xff]
      %v178 = vld [vmem:[%s1 + $0x10] sm:$0xff]
      %v179 = vld [vmem:[%s1 + $0x18] sm:$0xff]
      %v180 = vld [vmem:[%s1 + $0x20] sm:$0xff]
      %v181 = vld [vmem:[%s2] sm:$0x1]
      %v183 = vlaneseq
      %v184 = vshrl.u32 %v183, 7
      %v185 = vsub.s32 0, %v184
      %v186 = vrot.slane %v181, %v185
      %vm188 = vcmask 326656
      %v190 = vsel %vm188, %v174, 0
      %v193 = vsel %vm188, %v175, 0
      %195 = vmatprep.subr.mxu0 0.0
      %196 = vmatpush1.msra.mxu0 %v176
      %197 = vmatprep.subr.mxu0 0.0
      %198 = vmatpush1.msra.mxu0 %v177
      %199 = vmatprep.subr.mxu0 0.0
      %200 = vmatpush1.msra.mxu0 %v178
      %201 = vmatprep.subr.mxu0 0.0
      %202 = vmatpush1.msra.mxu0 %v179
      %203 = vmatprep.subr.mxu0 0.0
      %204 = vmatpush1.msra.mxu0 %v180
      %205 = vmatprep.subr.mxu0 0.0
      %206 = vmatpush1.msra.mxu0 0.0
      %207 = vmatprep.subr.mxu0 0.0
      %208 = vmatpush1.msra.mxu0 0.0
      %209 = vmatprep.subr.mxu0 0.0
      %210 = vmatpush1.msra.mxu0 0.0
      %211 = vmatprep.subr.mxu0 0.0
      %212 = vmatpush1.msra.mxu0 0.0
      %213 = vmatprep.subr.mxu0 0.0
      %214 = vmatpush1.msra.mxu0 0.0
      %215 = vmatprep.subr.mxu0 0.0
      %216 = vmatpush1.msra.mxu0 0.0
      %217 = vmatprep.subr.mxu0 0.0
      %218 = vmatpush1.msra.mxu0 0.0
      %219 = vmatprep.subr.mxu0 0.0
      %220 = vmatpush1.msra.mxu0 0.0
      %221 = vmatprep.subr.mxu0 0.0
      %222 = vmatpush1.msra.mxu0 0.0
      %223 = vmatprep.subr.mxu0 0.0
      %224 = vmatpush1.msra.mxu0 0.0
      %225 = vmatprep.subr.mxu0 0.0
      %226 = vmatpush1.msra.mxu0 0.0
      %227 = vmatprep.subr.mxu0 0.0
      %228 = vmatpush1.msra.mxu0 0.0
      %229 = vmatprep.subr.mxu0 0.0
      %230 = vmatpush1.msra.mxu0 0.0
      %231 = vmatprep.subr.mxu0 0.0
      %232 = vmatpush1.msra.mxu0 0.0
      %233 = vmatprep.subr.mxu0 0.0
      %234 = vmatpush1.msra.mxu0 0.0
      %235 = vmatprep.subr.mxu0 0.0
      %236 = vmatpush1.msra.mxu0 0.0
      %237 = vmatprep.subr.mxu0 0.0
      %238 = vmatpush1.msra.mxu0 0.0
      %239 = vmatprep.subr.mxu0 0.0
      %240 = vmatpush1.msra.mxu0 0.0
      %241 = vmatprep.subr.mxu0 0.0
      %242 = vmatpush1.msra.mxu0 0.0
      %243 = vmatprep.subr.mxu0 0.0
      %244 = vmatpush1.msra.mxu0 0.0
      %245 = vmatprep.subr.mxu0 0.0
      %246 = vmatpush1.msra.mxu0 0.0
      %247 = vmatprep.subr.mxu0 0.0
      %248 = vmatpush1.msra.mxu0 0.0
      %249 = vmatprep.subr.mxu0 0.0
      %250 = vmatpush1.msra.mxu0 0.0
      %251 = vmatprep.subr.mxu0 0.0
      %252 = vmatpush1.msra.mxu0 0.0
      %253 = vmatprep.subr.mxu0 0.0
      %254 = vmatpush1.msra.mxu0 0.0
      %255 = vmatprep.subr.mxu0 0.0
      %256 = vmatpush1.msra.mxu0 0.0
      %257 = vmatprep.subr.mxu0 0.0
      %258 = vmatpush1.msra.mxu0 0.0
      %259 = vmatprep.mubr.f32.mxu0 0.0
      %260 = vmatmul.mubr.f32.gmra.mrb[0].mxu0 %v190
      %v261 = vpop.f32.mrb[0].mxu0
      %v262 = vadd.f32 %v186, %v261
      %v263 = vpop.f32.mrb[0].mxu0
      %264 = vmatprep.mubr.f32.mxu0 0.0
      %265 = vmatmul.mubr.f32.gmra.mrb[0].mxu0 %v193
      %v266 = vpop.f32.mrb[0].mxu0
      %v267 = vadd.f32 %v186, %v266
      %v268 = vpop.f32.mrb[0].mxu0
      %269 = vdwg.mxu0
      %270 = vst [vmem:[%s172] sm:$0xff] %v262
      %271 = vst [vmem:[%s172 + $0x8] sm:$0xff] %v267
      %s272 = smul.u32 2, %s14
      %p273 = scmp.lt.s32.totalorder %s272, 3
      %s274 = scalar_select %p273, %s272, 3
      %s275 = smul.addr %s274, 8
      %s276 = scalar_lea.vmem %s3, %s275
      // Predicated region
      $region33: #{stream_conv2d.1} parent=31 // pred_check
        %p277 = pneg %p100
      $region34: #{stream_conv2d.1} parent=31 // pred_check_branch
        %279 = sbr.rel (%p277) target = $region36
      $region35: #{stream_conv2d.1} parent=31 // pred_region
        %s280 = smul.u32 2, %s14
      $region36: #{stream_conv2d.1} parent=31 // pred_fallthru
        _
    $region32: #{stream_conv2d.1} parent=5 // pred_fallthru
      _
    %p281 = scmp.le.s32.totalorder 2, %s9
    // Predicated region
    $region37: #{stream_conv2d.1} parent=5 // pred_check
      %p282 = pneg %p281
    $region38: #{stream_conv2d.1} parent=5 // pred_check_branch
      %284 = sbr.rel (%p282) target = $region40
    $region39: #{stream_conv2d.1} parent=5 // pred_region
      %s285 = ssub.s32 %s9, 2
      // Predicated region
      $region41: #{stream_conv2d.1} parent=39 // pred_check
        %p286 = pneg %p106
      $region42: #{stream_conv2d.1} parent=39 // pred_check_branch
        %288 = sbr.rel (%p286) target = $region44
      $region43: #{stream_conv2d.1} parent=39 // pred_region
        %s289 = smul.u32 2, %s15
        %p290 = scmp.lt.s32.totalorder %s289, 3
        %s291 = scalar_select %p290, %s289, 3
        %s292 = smul.addr %s291, 8
        %s293 = scalar_lea.vmem %s3, %s292
      $region44: #{stream_conv2d.1} parent=39 // pred_fallthru
        _
    $region40: #{stream_conv2d.1} parent=5 // pred_fallthru
      _
  $region6: #{stream_conv2d.1} parent=0 // loop_footer
    %s13 = sadd.s32 1, %s9
  $region7: #{stream_conv2d.1} parent=0 // loop_footer_branch
    %8 = sbr.rel target = $region3
  $region8: #{stream_conv2d.1} parent=0 // loop_exit
    _

</llo_original>
